<compile_context>
chip_gen: v7x
topology: tpu7x:2x2x1
jax: 0.10.0
libtpu: 0.0.40
codegen_flags: <defaults>
</compile_context>

<pallas_src>
import math

import jax
import jax.numpy as jnp
from jax.experimental import pallas as pl
from jax.experimental.pallas import tpu as pltpu

_EPS = 1e-5
_NCORES = 2              # leading "parallel" axis for the stats pass (2 TCs on v7x)
_MiB = 1024 * 1024


def _round_up(a, b):
    return ((a + b - 1) // b) * b


def _vmem_budget_bytes():
    """Half of physical VMEM, clamped to [16 MiB, 64 MiB]; safe on v5e/v6e/v7x."""
    try:
        cap = int(pltpu.get_tpu_info().vmem_capacity_bytes)
    except Exception:
        cap = 64 * _MiB
    return int(max(16 * _MiB, min(cap // 2, 64 * _MiB)))


def _sublane(itemsize):
    # native sublane packing: 8 rows (4B), 16 rows (2B), 32 rows (1B)
    return max(8, 32 // int(itemsize))


def _pick_tile(rows_want, sub, chunk_target):
    """Pick (tile_rows, chunk_rows) with chunk_rows | tile_rows, both multiples of sub."""
    rows_want = max(sub, (int(rows_want) // sub) * sub)
    ch = max(sub, (min(int(chunk_target), rows_want) // sub) * sub)
    tr = max(ch, (rows_want // ch) * ch)
    return tr, ch


def _lane_params(gamma, beta, k, D, Dp):
    """gamma/beta tiled over the k lane groups and zero-padded to Dp lanes, as (1, Dp) f32."""
    g = jnp.tile(gamma.reshape(-1).astype(jnp.float32), (k,))
    b = jnp.tile(beta.reshape(-1).astype(jnp.float32), (k,))
    if Dp > k * D:
        g = jnp.pad(g, (0, Dp - k * D))
        b = jnp.pad(b, (0, Dp - k * D))
    return g.reshape(1, Dp), b.reshape(1, Dp)


def _moment_loop(x_ref, n_chunks, CH, Dp, sub, row0, n_valid, masked):
    """Accumulate (8, Dp) f32 partial sum / sum-of-squares over n_chunks row chunks.

    The (CH, Dp) -> (CH//8, 8, Dp) reshape keeps the per-chunk reduction as
    full-vreg VPU adds; the cross-sublane reduce happens only once at finalize.
    """
    zeros8 = jnp.zeros((8, Dp), jnp.float32)
    row_iota = (jax.lax.broadcasted_iota(jnp.int32, (CH, Dp), 0) if masked else None)

    def body(j, carry):
        s, q = carry
        off = pl.multiple_of(j * CH, sub)
        xb = x_ref[pl.ds(off, CH), :].astype(jnp.float32)
        if masked:
            valid = (row_iota + (row0 + j * CH)) < n_valid
            xb = jnp.where(valid, xb, 0.0)
        s = s + xb.reshape(CH // 8, 8, Dp).sum(axis=0)
        q = q + (xb * xb).reshape(CH // 8, 8, Dp).sum(axis=0)
        return s, q

    return jax.lax.fori_loop(0, n_chunks, body, (zeros8, zeros8))


def _make_fused_kernel(*, D, k, Dp, Nf, CH, R, inv_n, eps, sub):
    """Single-kernel path: stats + normalize, one HBM read of x."""
    n_chunks = R // CH
    fold_steps = int(k).bit_length() - 1     # k is 1 or a power of two

    def kernel(x_ref, gamma_ref, beta_ref, o_ref):
        s8, q8 = _moment_loop(x_ref, n_chunks, CH, Dp, sub, 0, Nf, True)
        s = jnp.sum(s8, axis=0, keepdims=True)          # (1, Dp): one XLU reduce
        q = jnp.sum(q8, axis=0, keepdims=True)
        # Fold the k lane groups (width D each): roll-add tree; the result is the
        # per-feature total broadcast to every group -- the layout scale/shift need.
        for t in range(fold_steps):
            sh = D * (1 << t)
            s = s + pltpu.roll(s, shift=sh, axis=1)
            q = q + pltpu.roll(q, shift=sh, axis=1)
        mean = s * inv_n
        var = jnp.maximum(q * inv_n - mean * mean, 0.0)
        inv_std = jax.lax.rsqrt(var + eps)
        scale = gamma_ref[...] * inv_std
        shift = beta_ref[...] - mean * scale

        def norm_body(j, carry):
            off = pl.multiple_of(j * CH, sub)
            xb = x_ref[pl.ds(off, CH), :].astype(jnp.float32)
            o_ref[pl.ds(off, CH), :] = (xb * scale + shift).astype(o_ref.dtype)
            return carry

        jax.lax.fori_loop(0, n_chunks, norm_body, 0)

    return kernel


def _make_stats_kernel(*, Dp, TR, CH, Tc, Nf, sub):
    """Pass 1: per-core (8, Dp) partial sum / sum-of-squares accumulation."""
    n_chunks = TR // CH

    def kernel(x_ref, sum_ref, sq_ref):
        c = pl.program_id(0)
        i = pl.program_id(1)

        @pl.when(i == 0)
        def _():
            sum_ref[...] = jnp.zeros_like(sum_ref)
            sq_ref[...] = jnp.zeros_like(sq_ref)

        tile_idx = c * Tc + i                 # logical row-tile index (may exceed T-1)
        row0 = tile_idx * TR
        full = (row0 + TR) <= Nf              # entirely in-bounds -> skip the row mask

        @pl.when(full)
        def _():
            s, q = _moment_loop(x_ref, n_chunks, CH, Dp, sub, row0, Nf, False)
            sum_ref[...] += s
            sq_ref[...] += q

        @pl.when(jnp.logical_not(full))
        def _():
            s, q = _moment_loop(x_ref, n_chunks, CH, Dp, sub, row0, Nf, True)
            sum_ref[...] += s
            sq_ref[...] += q

    return kernel


def _normalize_kernel(x_ref, scale_ref, shift_ref, o_ref):
    """Pass 2: y = x * scale + shift (out-of-bounds rows/lanes dropped at writeback)."""
    x = x_ref[...].astype(jnp.float32)
    o_ref[...] = (x * scale_ref[...] + shift_ref[...]).astype(o_ref.dtype)


def normalization_batch(x, gamma, beta, *, eps=_EPS, force_two_pass=False,
                        pass1_tile_rows=None, pass2_tile_rows=None):
    """BatchNorm1d (training-mode batch statistics) applied as in the PyTorch module.

    x: (..., D) activations; gamma/beta: (D,) affine parameters.
    Returns an array with the same shape and dtype as x.
    """
    orig_shape = x.shape
    D = int(orig_shape[-1])
    N = int(math.prod(orig_shape[:-1]))
    assert gamma.shape[-1] == D and beta.shape[-1] == D
    in_dt = x.dtype
    itemsize = jnp.dtype(in_dt).itemsize
    sub = _sublane(itemsize)

    # Lane-dense layout: fold k = 128//D rows into the lane axis for small D;
    # otherwise present a lane-padded block of width round_up(D, 128).
    if D < 128 and (128 % D == 0) and (N % (128 // D) == 0):
        k = 128 // D
    else:
        k = 1
    Dl = k * D                      # logical lane width of the reshaped x
    Dp = _round_up(Dl, 128)         # lane width presented to the kernels
    Nf = N // k                     # folded row count
    x2 = x.reshape(Nf, Dl)          # contiguous reshape (no data movement)

    inv_n = 1.0 / float(N)
    vmem_limit = _vmem_budget_bytes()

    # ~512 KiB (f32) inner chunks bound the generated code size at any tile size.
    chunk_target = max(sub, (((512 * 1024) // (Dp * 4)) // sub) * sub)

    # ---------------- fused single-read path ----------------
    ch_f = max(sub, (min(chunk_target, _round_up(Nf, sub)) // sub) * sub)
    R_f = _round_up(Nf, ch_f)
    fused_vmem = (2 * R_f * Dp * 2 * itemsize          # (double-buffered) in + out tiles
                  + 8 * ch_f * Dp * 4 + 64 * Dp)       # chunk temps, params, partials
    if ((not force_two_pass)
            and fused_vmem <= int(0.75 * vmem_limit)
            and R_f * Dp * itemsize <= 8 * _MiB):
        gamma_p, beta_p = _lane_params(gamma, beta, k, D, Dp)
        out = pl.pallas_call(
            _make_fused_kernel(D=D, k=k, Dp=Dp, Nf=Nf, CH=ch_f, R=R_f,
                               inv_n=inv_n, eps=eps, sub=sub),
            grid=(1,),
            in_specs=[pl.BlockSpec((R_f, Dp), lambda i: (0, 0)),
                      pl.BlockSpec((1, Dp), lambda i: (0, 0)),
                      pl.BlockSpec((1, Dp), lambda i: (0, 0))],
            out_specs=pl.BlockSpec((R_f, Dp), lambda i: (0, 0)),
            out_shape=jax.ShapeDtypeStruct((Nf, Dl), in_dt),
            compiler_params=pltpu.CompilerParams(
                dimension_semantics=("arbitrary",),
                vmem_limit_bytes=vmem_limit),
        )(x2, gamma_p, beta_p)
        return out.reshape(orig_shape)

    # ---------------- pass 1: per-core partial sum / sum-of-squares ----------------
    rows1 = min((int(0.65 * vmem_limit) - 8 * chunk_target * Dp * 4) // (2 * Dp * itemsize),
                (8 * _MiB) // (Dp * itemsize),          # <= 8 MiB of x per grid step
                _round_up(Nf, sub))
    if pass1_tile_rows is not None:
        rows1 = min(rows1, int(pass1_tile_rows))
    TR1, CH1 = _pick_tile(rows1, sub, chunk_target)
    T = pl.cdiv(Nf, TR1)           # logical row tiles
    Tc = pl.cdiv(T, _NCORES)       # row tiles per core (logical tiles >= T are masked out)

    psum, psq = pl.pallas_call(
        _make_stats_kernel(Dp=Dp, TR=TR1, CH=CH1, Tc=Tc, Nf=Nf, sub=sub),
        grid=(_NCORES, Tc),
        in_specs=[pl.BlockSpec(
            (TR1, Dp), lambda c, i: (jnp.minimum(c * Tc + i, T - 1), 0))],
        out_specs=(pl.BlockSpec((8, Dp), lambda c, i: (c, 0)),
                   pl.BlockSpec((8, Dp), lambda c, i: (c, 0))),
        out_shape=(jax.ShapeDtypeStruct((_NCORES * 8, Dp), jnp.float32),
                   jax.ShapeDtypeStruct((_NCORES * 8, Dp), jnp.float32)),
        compiler_params=pltpu.CompilerParams(
            dimension_semantics=("parallel", "arbitrary"),
            vmem_limit_bytes=vmem_limit),
    )(x2)

    # ---------------- finalize (tiny, wrapper-side) ----------------
    tot_s = psum.sum(axis=0)[:Dl].reshape(k, D).sum(axis=0)
    tot_q = psq.sum(axis=0)[:Dl].reshape(k, D).sum(axis=0)
    mean = tot_s * inv_n
    var = jnp.maximum(tot_q * inv_n - mean * mean, 0.0)
    inv_std = jax.lax.rsqrt(var + eps)
    scale = gamma.reshape(-1).astype(jnp.float32) * inv_std
    shift = beta.reshape(-1).astype(jnp.float32) - mean * scale
    scale_l = jnp.tile(scale, (k,))
    shift_l = jnp.tile(shift, (k,))
    if Dp > Dl:                                         # zero pad lanes -> pad outputs inert
        scale_l = jnp.pad(scale_l, (0, Dp - Dl))
        shift_l = jnp.pad(shift_l, (0, Dp - Dl))
    scale2 = scale_l.reshape(1, Dp)
    shift2 = shift_l.reshape(1, Dp)

    # ---------------- pass 2: y = x * scale + shift ----------------
    rows2 = min(int(0.65 * vmem_limit) // (Dp * (4 * itemsize + 4)),
                (4 * _MiB) // (Dp * itemsize),          # <= 4 MiB of x per grid step
                _round_up(Nf, sub))
    if pass2_tile_rows is not None:
        rows2 = min(rows2, int(pass2_tile_rows))
    TR2 = max(sub, (int(rows2) // sub) * sub)
    T2 = pl.cdiv(Nf, TR2)

    out = pl.pallas_call(
        _normalize_kernel,
        grid=(T2,),
        in_specs=[pl.BlockSpec((TR2, Dp), lambda i: (i, 0)),
                  pl.BlockSpec((1, Dp), lambda i: (0, 0)),
                  pl.BlockSpec((1, Dp), lambda i: (0, 0))],
        out_specs=pl.BlockSpec((TR2, Dp), lambda i: (i, 0)),
        out_shape=jax.ShapeDtypeStruct((Nf, Dl), in_dt),
        compiler_params=pltpu.CompilerParams(
            dimension_semantics=("parallel",),
            vmem_limit_bytes=vmem_limit),
    )(x2, scale2, shift2)
    return out.reshape(orig_shape)


def _reference(x, gamma, beta, eps=_EPS):
    D = x.shape[-1]
    x2d = x.reshape(-1, D).astype(jnp.float32)
    mean = jnp.mean(x2d, axis=0, keepdims=True)
    var = jnp.mean((x2d - mean) ** 2, axis=0, keepdims=True)
    y = (x2d - mean) / jnp.sqrt(var + eps) * gamma.astype(jnp.float32) \
        + beta.astype(jnp.float32)
    return y.reshape(x.shape).astype(x.dtype)


if __name__ == "__main__":
    key = jax.random.PRNGKey(0)

    def init_params(kg, kb, D):
        # Mirrors `init_parameters`: uniform(-stdv, stdv), stdv = 1/sqrt(embed_dim).
        stdv = 1.0 / math.sqrt(D)
        g = jax.random.uniform(kg, (D,), minval=-stdv, maxval=stdv, dtype=jnp.float32)
        b = jax.random.uniform(kb, (D,), minval=-stdv, maxval=stdv, dtype=jnp.float32)
        return g, b

    def check(out, x, g, b, tol, name):
        ref = _reference(x, g, b)
        assert out.shape == x.shape and out.dtype == x.dtype, name
        ok = jnp.allclose(out.astype(jnp.float32), ref.astype(jnp.float32),
                          atol=tol, rtol=tol)
        assert bool(ok), "mismatch: " + name

    # 1) Module-sized input (B, S, D) = (2, 8, 32): fused path, lane fold k = 4.
    k1, k2, k3, key = jax.random.split(key, 4)
    x = jax.random.normal(k1, (2, 8, 32), dtype=jnp.float32)
    g, b = init_params(k2, k3, 32)
    out = jax.block_until_ready(normalization_batch(x, g, b))
    check(out, x, g, b, 3e-5, "fused, k=4")

    # 2) D = 48 (does not divide 128): lane-padded fused path (Dp = 128, k = 1).
    k1, k2, k3, key = jax.random.split(key, 4)
    x = jax.random.normal(k1, (3, 20, 48), dtype=jnp.float32)
    g, b = init_params(k2, k3, 48)
    out = jax.block_until_ready(normalization_batch(x, g, b))
    check(out, x, g, b, 3e-5, "fused, padded lanes D=48")

    # 3) Two-pass path: ragged row tiles, k = 2 lane fold, 2-core stats split.
    k1, k2, k3, key = jax.random.split(key, 4)
    x = jax.random.normal(k1, (4, 125, 64), dtype=jnp.float32)
    g, b = init_params(k2, k3, 64)
    out = jax.block_until_ready(normalization_batch(
        x, g, b, force_two_pass=True, pass1_tile_rows=64, pass2_tile_rows=48))
    check(out, x, g, b, 3e-5, "two-pass, k=2, ragged")

    # 4) Two-pass path, D = 128, odd tile count (exercises the clamped OOB tile).
    k1, k2, k3, key = jax.random.split(key, 4)
    x = jax.random.normal(k1, (2, 77, 128), dtype=jnp.float32)
    g, b = init_params(k2, k3, 128)
    out = jax.block_until_ready(normalization_batch(
        x, g, b, force_two_pass=True, pass1_tile_rows=56, pass2_tile_rows=64))
    check(out, x, g, b, 3e-5, "two-pass, k=1, clamp")

    # 5) bf16 activations (16-row sublane packing), two-pass path.
    k1, k2, k3, key = jax.random.split(key, 4)
    x = jax.random.normal(k1, (2, 64, 64), dtype=jnp.bfloat16)
    g, b = init_params(k2, k3, 64)
    out = jax.block_until_ready(normalization_batch(
        x, g, b, force_two_pass=True, pass1_tile_rows=32, pass2_tile_rows=32))
    check(out, x, g, b, 2e-2, "two-pass, bf16")

    print("KERNEL_OK")
</pallas_src>

<mosaic_0001>
module attributes {stable_mosaic.version = 11 : i64} {
  func.func @kernel(%arg0: i32, %arg1: memref<8x128xf32, #tpu.memory_space<vmem>>, %arg2: memref<1x128xf32, #tpu.memory_space<vmem>>, %arg3: memref<1x128xf32, #tpu.memory_space<vmem>>, %arg4: memref<8x128xf32, #tpu.memory_space<vmem>>) attributes {dimension_semantics = [#tpu.dimension_semantics<arbitrary>], iteration_bounds = array<i64: 1>, scalar_prefetch = 0 : i64, scratch_operands = 0 : i64, tpu.core_type = #tpu.core_type<tc>, window_params = [{transform_indices = @transform_0, window_bounds = array<i64: 8, 128>}, {pipeline_mode = #tpu.pipeline_mode<synchronous>, transform_indices = @transform_1, window_bounds = array<i64: 1, 128>}, {pipeline_mode = #tpu.pipeline_mode<synchronous>, transform_indices = @transform_2, window_bounds = array<i64: 1, 128>}, {transform_indices = @transform_3, window_bounds = array<i64: 8, 128>}]} {
    %cst = arith.constant 0.000000e+00 : f32
    %0 = vector.broadcast %cst : f32 to vector<8x128xf32>
    %1 = tpu.iota {dimensions = array<i32: 0>} : vector<8x128xi32>
    %c0_i32 = arith.constant 0 : i32
    %c8_i32 = arith.constant 8 : i32
    %2 = arith.muli %c0_i32, %c8_i32 : i32
    %3 = tpu.assume_multiple %2, 8 : i32
    %4 = arith.index_cast %3 : i32 to index
    %c0 = arith.constant 0 : index
    %5 = vector.load %arg1[%4, %c0] : memref<8x128xf32, #tpu.memory_space<vmem>>, vector<8x128xf32>
    %c8_i32_0 = arith.constant 8 : i32
    %6 = arith.muli %c0_i32, %c8_i32_0 : i32
    %c0_i32_1 = arith.constant 0 : i32
    %7 = arith.addi %c0_i32_1, %6 : i32
    %8 = vector.broadcast %7 : i32 to vector<8x128xi32>
    %9 = arith.addi %1, %8 : vector<8x128xi32>
    %c4_i32 = arith.constant 4 : i32
    %10 = vector.broadcast %c4_i32 : i32 to vector<8x128xi32>
    %11 = arith.cmpi slt, %9, %10 : vector<8x128xi32>
    %cst_2 = arith.constant 0.000000e+00 : f32
    %12 = vector.broadcast %cst_2 : f32 to vector<8x128xf32>
    %13 = arith.select %11, %5, %12 : vector<8x128xi1>, vector<8x128xf32>
    %14 = vector.shape_cast %13 : vector<8x128xf32> to vector<1x8x128xf32>
    %cst_3 = arith.constant dense<0.000000e+00> : vector<8x128xf32>
    %15 = vector.multi_reduction <add>, %14, %cst_3 [0] : vector<1x8x128xf32> to vector<8x128xf32>
    %16 = arith.addf %0, %15 : vector<8x128xf32>
    %17 = arith.mulf %13, %13 : vector<8x128xf32>
    %18 = vector.shape_cast %17 : vector<8x128xf32> to vector<1x8x128xf32>
    %cst_4 = arith.constant dense<0.000000e+00> : vector<8x128xf32>
    %19 = vector.multi_reduction <add>, %18, %cst_4 [0] : vector<1x8x128xf32> to vector<8x128xf32>
    %20 = arith.addf %0, %19 : vector<8x128xf32>
    %c1_i32 = arith.constant 1 : i32
    %cst_5 = arith.constant dense<0.000000e+00> : vector<128xf32>
    %21 = vector.multi_reduction <add>, %16, %cst_5 [0] : vector<8x128xf32> to vector<128xf32>
    %22 = vector.shape_cast %21 : vector<128xf32> to vector<1x128xf32>
    %cst_6 = arith.constant dense<0.000000e+00> : vector<128xf32>
    %23 = vector.multi_reduction <add>, %20, %cst_6 [0] : vector<8x128xf32> to vector<128xf32>
    %24 = vector.shape_cast %23 : vector<128xf32> to vector<1x128xf32>
    %c32_i32 = arith.constant 32 : i32
    %25 = tpu.dynamic_rotate %22 by %c32_i32 dim 1 : vector<1x128xf32>, i32 -> vector<1x128xf32>
    %26 = arith.addf %22, %25 : vector<1x128xf32>
    %c32_i32_7 = arith.constant 32 : i32
    %27 = tpu.dynamic_rotate %24 by %c32_i32_7 dim 1 : vector<1x128xf32>, i32 -> vector<1x128xf32>
    %28 = arith.addf %24, %27 : vector<1x128xf32>
    %c64_i32 = arith.constant 64 : i32
    %29 = tpu.dynamic_rotate %26 by %c64_i32 dim 1 : vector<1x128xf32>, i32 -> vector<1x128xf32>
    %30 = arith.addf %26, %29 : vector<1x128xf32>
    %c64_i32_8 = arith.constant 64 : i32
    %31 = tpu.dynamic_rotate %28 by %c64_i32_8 dim 1 : vector<1x128xf32>, i32 -> vector<1x128xf32>
    %32 = arith.addf %28, %31 : vector<1x128xf32>
    %cst_9 = arith.constant 6.250000e-02 : f32
    %33 = vector.broadcast %cst_9 : f32 to vector<1x128xf32>
    %34 = arith.mulf %30, %33 : vector<1x128xf32>
    %cst_10 = arith.constant 6.250000e-02 : f32
    %35 = vector.broadcast %cst_10 : f32 to vector<1x128xf32>
    %36 = arith.mulf %32, %35 : vector<1x128xf32>
    %37 = arith.mulf %34, %34 : vector<1x128xf32>
    %38 = arith.subf %36, %37 : vector<1x128xf32>
    %cst_11 = arith.constant 0.000000e+00 : f32
    %39 = vector.broadcast %cst_11 : f32 to vector<1x128xf32>
    %40 = arith.maximumf %38, %39 : vector<1x128xf32>
    %cst_12 = arith.constant 9.99999974E-6 : f32
    %41 = vector.broadcast %cst_12 : f32 to vector<1x128xf32>
    %42 = arith.addf %40, %41 : vector<1x128xf32>
    %43 = math.rsqrt %42 : vector<1x128xf32>
    %c0_13 = arith.constant 0 : index
    %c0_14 = arith.constant 0 : index
    %44 = vector.load %arg2[%c0_13, %c0_14] : memref<1x128xf32, #tpu.memory_space<vmem>>, vector<1x128xf32>
    %45 = arith.mulf %44, %43 : vector<1x128xf32>
    %c0_15 = arith.constant 0 : index
    %c0_16 = arith.constant 0 : index
    %46 = vector.load %arg3[%c0_15, %c0_16] : memref<1x128xf32, #tpu.memory_space<vmem>>, vector<1x128xf32>
    %47 = arith.mulf %34, %45 : vector<1x128xf32>
    %48 = arith.subf %46, %47 : vector<1x128xf32>
    %c0_i32_17 = arith.constant 0 : i32
    %c8_i32_18 = arith.constant 8 : i32
    %49 = arith.muli %c0_i32_17, %c8_i32_18 : i32
    %50 = tpu.assume_multiple %49, 8 : i32
    %51 = arith.index_cast %50 : i32 to index
    %c0_19 = arith.constant 0 : index
    %52 = vector.load %arg1[%51, %c0_19] : memref<8x128xf32, #tpu.memory_space<vmem>>, vector<8x128xf32>
    %53 = vector.broadcast %45 : vector<1x128xf32> to vector<8x128xf32>
    %54 = arith.mulf %52, %53 : vector<8x128xf32>
    %55 = vector.broadcast %48 : vector<1x128xf32> to vector<8x128xf32>
    %56 = arith.addf %54, %55 : vector<8x128xf32>
    %57 = arith.index_cast %50 : i32 to index
    %c0_20 = arith.constant 0 : index
    %58 = vector.load %arg4[%57, %c0_20] : memref<8x128xf32, #tpu.memory_space<vmem>>, vector<8x128xf32>
    tpu.vector_store %arg4[%57, %c0_20], %56 {strides = array<i32>} : memref<8x128xf32, #tpu.memory_space<vmem>>, vector<8x128xf32>,
    %c1_i32_21 = arith.constant 1 : i32
    return
  }
  func.func @transform_0(%arg0: i32) -> (i32, i32) {
    %c0_i32 = arith.constant 0 : i32
    %c0_i32_0 = arith.constant 0 : i32
    %c0_i32_1 = arith.constant 0 : i32
    return %c0_i32, %c0_i32_0 : i32, i32
  }
  func.func @transform_1(%arg0: i32) -> (i32, i32) {
    %c0_i32 = arith.constant 0 : i32
    %c0_i32_0 = arith.constant 0 : i32
    %c0_i32_1 = arith.constant 0 : i32
    return %c0_i32, %c0_i32_0 : i32, i32
  }
  func.func @transform_2(%arg0: i32) -> (i32, i32) {
    %c0_i32 = arith.constant 0 : i32
    %c0_i32_0 = arith.constant 0 : i32
    %c0_i32_1 = arith.constant 0 : i32
    return %c0_i32, %c0_i32_0 : i32, i32
  }
  func.func @transform_3(%arg0: i32) -> (i32, i32) {
    %c0_i32 = arith.constant 0 : i32
    %c0_i32_0 = arith.constant 0 : i32
    %c0_i32_1 = arith.constant 0 : i32
    return %c0_i32, %c0_i32_0 : i32, i32
  }
}

</mosaic_0001>

<llo_original>
// kernel: tpu_custom_call.1
$region0: #{tpu_custom_call.1}
  #allocation0 [shape = 'u32[]', space=smem, size = 0x4, offset = 0x4, fixed_abs, tag = 'smem constant byte address 0x4 - core index']
  #allocation1 [shape = 'u32[144,128]{1,0:T(1,128)}', space=vmem, size = 0x12000, scoped, tag = 'internal scratch']
  %s0 = inlined_call_operand.hbm [shape: f32[4,128], index: 0, kind: input, shape index: {}]
  %s1 = inlined_call_operand.vmem [shape: f32[1,128], index: 1, kind: input, shape index: {}]
  %s2 = inlined_call_operand.vmem [shape: f32[1,128], index: 2, kind: input, shape index: {}]
  %s3 = inlined_call_operand.hbm [shape: f32[4,128], index: 3, kind: output, shape index: {}]
  %s4 = sld [smem:[#allocation0]]
  $region26: #{tpu_custom_call.1} parent=0
    _
  %s6 = ssub.s32 1, %s4
  %s7 = scalar_select 0, %s6, %s4
  $region1: #{tpu_custom_call.1} parent=0
    #allocation2 [shape = 'u8[4096]{0}', space=vmem, size = 0x1000, scoped, tag = 'input window, operand 0, single buffered']
    #allocation3 [shape = 's32[1]{0}', space=sflag, size = 0x4, scoped, tag = 'scoped memory for tpu_custom_call.1']
    #allocation4 [shape = 's32[1]{0}', space=sflag, size = 0x4, scoped, tag = 'scoped memory for tpu_custom_call.1']
    #allocation5 [shape = 'u8[4096]{0}', space=vmem, size = 0x1000, scoped, tag = 'output window, operand 0, single buffered']
    %8 = vsyncpa [#allocation3], 0
    %9 = vsyncpa [#allocation4], 0
    // Predicated region
    $region2: #{tpu_custom_call.1} parent=1 // pred_check
      _
    $region3: #{tpu_custom_call.1} parent=1 // pred_check_branch
      %11 = sbr.rel (0) target = $region5
    $region4: #{tpu_custom_call.1} parent=1 // pred_region
      %s13 = ssub.s32 128, 64
      %14 = vsyncadd [#allocation3], %s13
      %s15 = sshll.u32 [#allocation2], 4
      %s16 = int_to_ptr.vmem [resolvable:$true] %s15
      %21 = dma.hbm_to_vmem [thread:$0]  %s0, 64, %s16, [#allocation3], 64, 64, 4
    $region5: #{tpu_custom_call.1} parent=1 // pred_fallthru
      _
    // Predicated region
    $region6: #{tpu_custom_call.1} parent=1 // pred_check
      _
    $region7: #{tpu_custom_call.1} parent=1 // pred_check_branch
      %23 = sbr.rel (0) target = $region9
    $region8: #{tpu_custom_call.1} parent=1 // pred_region
      _
    $region9: #{tpu_custom_call.1} parent=1 // pred_fallthru
      _
    // Predicated region
    $region10: #{tpu_custom_call.1} parent=1 // pred_check
      _
    $region11: #{tpu_custom_call.1} parent=1 // pred_check_branch
      %25 = sbr.rel (0) target = $region13
    $region12: #{tpu_custom_call.1} parent=1 // pred_region
      _
    $region13: #{tpu_custom_call.1} parent=1 // pred_fallthru
      _
    // Predicated region
    $region14: #{tpu_custom_call.1} parent=1 // pred_check
      _
    $region15: #{tpu_custom_call.1} parent=1 // pred_check_branch
      %27 = sbr.rel (0) target = $region17
    $region16: #{tpu_custom_call.1} parent=1 // pred_region
      %28 = dma.done [#allocation3], 128
    $region17: #{tpu_custom_call.1} parent=1 // pred_fallthru
      _
    %v29 = vlaneseq
    %v30 = vshrl.u32 %v29, 7
    %v31 = vld [vmem:[#allocation2] sm:$0xff]
    %vm32 = vcmp.lt.s32.totalorder %v30, 4
    %v33 = vsel %vm32, %v31, 0.0
    %v34 = vadd.f32 %v33, 0.0
    %v35 = vadd.f32 %v34, 0.0
    %v36 = vmul.f32 %v33, %v33
    %v37 = vadd.f32 %v36, 0.0
    %v38 = vadd.f32 %v37, 0.0
    %v39 = vrot.slane %v35, 4
    %v40 = vadd.f32 %v35, %v39
    %v41 = vrot.slane %v40, 2
    %v42 = vadd.f32 %v40, %v41
    %v43 = vrot.slane %v42, 1
    %v44 = vadd.f32 %v42, %v43
    %v45 = vrot.slane %v38, 4
    %v46 = vadd.f32 %v38, %v45
    %v47 = vrot.slane %v46, 2
    %v48 = vadd.f32 %v46, %v47
    %v49 = vrot.slane %v48, 1
    %v50 = vadd.f32 %v48, %v49
    %51 = vrot.lane.b32.xlu0 %v44, 32
    %v52 = vpop.permute.xlu0 %51
    %v53 = vadd.f32 %v44, %v52
    %54 = vrot.lane.b32.xlu0 %v50, 32
    %v55 = vpop.permute.xlu0 %54
    %v56 = vadd.f32 %v50, %v55
    %57 = vrot.lane.b32.xlu0 %v53, 64
    %v58 = vpop.permute.xlu0 %57
    %v59 = vadd.f32 %v53, %v58
    %60 = vrot.lane.b32.xlu0 %v56, 64
    %v61 = vpop.permute.xlu0 %60
    %v62 = vadd.f32 %v56, %v61
    %v63 = vmul.f32 %v59, 0.0625
    %v64 = vmul.f32 %v62, 0.0625
    %v65 = vmul.f32 %v63, %v63
    %v66 = vsub.f32 %v64, %v65
    %v67 = vmax.f32 %v66, 0.0
    %v68 = vadd.f32 %v67, 1e-05
    %v69 = vrsqrt.pop %v68
    %v70 = vld [vmem:[%s1] sm:$0x1]
    %v71 = vmul.f32 %v70, %v69
    %v72 = vld [vmem:[%s2] sm:$0x1]
    %v73 = vmul.f32 %v63, %v71
    %v74 = vsub.f32 %v72, %v73
    %v76 = vlaneseq
    %v77 = vshrl.u32 %v76, 7
    %v78 = vsub.s32 0, %v77
    %v79 = vrot.slane %v71, %v78
    %v81 = vmul.f32 %v31, %v79
    %v83 = vlaneseq
    %v84 = vshrl.u32 %v83, 7
    %v85 = vsub.s32 0, %v84
    %v86 = vrot.slane %v74, %v85
    %v88 = vadd.f32 %v81, %v86
    %89 = vst [vmem:[#allocation5] sm:$0xff] %v88
    // Predicated region
    $region18: #{tpu_custom_call.1} parent=1 // pred_check
      _
    $region19: #{tpu_custom_call.1} parent=1 // pred_check_branch
      %91 = sbr.rel (0) target = $region21
    $region20: #{tpu_custom_call.1} parent=1 // pred_region
      %s93 = ssub.s32 128, 64
      %94 = vsyncadd [#allocation4], %s93
      %s95 = sshll.u32 [#allocation5], 4
      %s96 = int_to_ptr.vmem [resolvable:$true] %s95
      %101 = dma.vmem_to_hbm [thread:$0]  %s96, 64, %s3, [#allocation4], 64, 64, 4
    $region21: #{tpu_custom_call.1} parent=1 // pred_fallthru
      _
    // Predicated region
    $region22: #{tpu_custom_call.1} parent=1 // pred_check
      _
    $region23: #{tpu_custom_call.1} parent=1 // pred_check_branch
      %103 = sbr.rel (0) target = $region25
    $region24: #{tpu_custom_call.1} parent=1 // pred_region
      %104 = dma.done [#allocation4], 128
    $region25: #{tpu_custom_call.1} parent=1 // pred_fallthru
      _
    %105 = vsyncpa [#allocation3], 1
    %106 = vsyncpa [#allocation4], 1

</llo_original>
